<compile_context>
chip_gen: v5e
topology: v5e:2x2
jax: 0.10.0
libtpu: 0.0.40
codegen_flags: <defaults>
</compile_context>

<pallas_src>
import numpy as np
import jax
import jax.numpy as jnp
from jax import lax
from jax.experimental import pallas as pl
from jax.experimental.pallas import tpu as pltpu


def _pad_to(n, m):
    return ((n + m - 1) // m) * m


def decoder_rnn_forward(seq_packed, batch_lengths, params, use_bf16=False):
    """seq_packed: (sum(batch_lengths), inputs_dim); batch_lengths: python list
    of non-increasing ints (PackedSequence batch sizes per timestep)."""
    batch_lengths = [int(l) for l in batch_lengths]
    # required so that rows that go inactive never become active again
    assert all(a >= b for a, b in zip(batch_lengths, batch_lengths[1:])), \
        "batch_lengths must be non-increasing (PackedSequence invariant)"

    T = len(batch_lengths)
    B = batch_lengths[0]
    D_in = int(seq_packed.shape[1])
    H = int(params["w_state"].shape[0])
    C = int(params["w_out"].shape[1])
    E = int(params["embed"].shape[1])

    B_pad = _pad_to(B, 8)                 # sublane multiple
    C_pad = _pad_to(C + 1, 128)           # +1 spare lane carries the commit idx
    C_oh = _pad_to(C, 8)                  # one-hot contraction width
    G = 6 * H                             # tightly packed gate dim
    G_pad = _pad_to(G, 128)

    f32 = np.float32
    mm_dtype = jnp.bfloat16 if use_bf16 else jnp.float32   # matmul operands

    # ---------------- one-time host-side weight fusion / packing -----------
    w_input = np.asarray(params["w_input"], f32)     # (D_in + E, 6H)
    w_state = np.asarray(params["w_state"], f32)     # (H, 5H)
    b_input = np.asarray(params["b_input"], f32).reshape(1, 6 * H)
    b_state = np.asarray(params["b_state"], f32).reshape(1, 5 * H)
    embed = np.asarray(params["embed"], f32)         # (C + 1, E)
    w_out = np.asarray(params["w_out"], f32)         # (H, C)
    b_out = np.asarray(params["b_out"], f32).reshape(1, C)

    w_x = w_input[:D_in]                              # x rows
    w_e = w_input[D_in:]                              # prev-obj-embed rows

    # both biases folded once into the precomputed input projection
    b_fused = b_input.copy()
    b_fused[:, :5 * H] += b_state

    # previous-class embedding folded through its input-linearity rows:
    #   row 0          -> embed[0]      ('start', only selected at t == 0)
    #   row c (1..C-1) -> embed[c + 1]  (predicted class c)
    embed_cls = np.zeros((C_oh, E), f32)
    embed_cls[0] = embed[0]
    embed_cls[1:C] = embed[2:C + 1]
    w_emb_cls = np.zeros((C_oh, G_pad), f32)
    w_emb_cls[:, :G] = embed_cls @ w_e

    w_state_p = np.zeros((H, G_pad), f32)             # no state -> highway slot
    w_state_p[:, :5 * H] = w_state

    w_out_p = np.zeros((H, C_pad), f32)
    w_out_p[:, :C] = w_out
    b_out_b = np.zeros((B_pad, C_pad), f32)            # pre-broadcast bias
    b_out_b[:, :C] = b_out

    # packed row -> flat (t * B_pad + b) index into the dense padded layout
    flat_idx = np.concatenate(
        [t * B_pad + np.arange(l) for t, l in enumerate(batch_lengths)]
    ).astype(np.int32)
    flat_idx_j = jnp.asarray(flat_idx)

    # -------- input projection hoisted out of the recurrence (one matmul) ---
    proj_packed = (jnp.dot(seq_packed.astype(jnp.float32), jnp.asarray(w_x),
                           precision="highest")
                   + jnp.asarray(b_fused))                       # (N, 6H)
    proj_flat = jnp.zeros((T * B_pad, G_pad), jnp.float32)
    proj_flat = proj_flat.at[flat_idx_j, :G].set(proj_packed)    # one scatter
    proj_x = proj_flat.reshape(T, B_pad, G_pad)

    # ---------------------------- kernel -----------------------------------
    def kernel(proj_ref, w_emb_ref, w_st_ref, w_out_ref, b_out_ref, out_ref):
        # hoisted loop invariants (JAX does not CSE broadcast_in_dim / iota)
        col = lax.broadcasted_iota(jnp.int32, (B_pad, C_pad), 1)
        valid = jnp.logical_and(col >= 1, col < C)     # real classes 1..C-1
        b_out_v = b_out_ref[...]
        oh0 = (col == 0).astype(mm_dtype)[:, :C_oh]    # 'start' token one-hot
        st0 = jnp.zeros((B_pad, H), jnp.float32)
        mem0 = jnp.zeros((B_pad, H), jnp.float32)

        def step(t, carry):
            oh, state, memory = carry                  # loop-carried vregs
            # precomputed input projection + the two recurrent projections
            proj = (proj_ref[t]
                    + jnp.dot(oh, w_emb_ref[...],
                              preferred_element_type=jnp.float32)
                    + jnp.dot(state.astype(mm_dtype), w_st_ref[...],
                              preferred_element_type=jnp.float32))

            def sl(k):                                  # gate k, width H
                return proj[:, k * H:(k + 1) * H]

            input_gate = jax.nn.sigmoid(sl(0))
            forget_gate = jax.nn.sigmoid(sl(1))
            memory_init = jnp.tanh(sl(2))
            output_gate = jax.nn.sigmoid(sl(3))
            memory_new = input_gate * memory_init + forget_gate * memory
            out = output_gate * jnp.tanh(memory_new)
            highway_gate = jax.nn.sigmoid(sl(4))
            out = highway_gate * out + (1.0 - highway_gate) * sl(5)

            pred = (jnp.dot(out.astype(mm_dtype), w_out_ref[...],
                            preferred_element_type=jnp.float32)
                    + b_out_v)                          # (B_pad, C_pad)

            # argmax over real classes 1..C-1 (first-max tie semantics)
            masked = jnp.where(valid, pred, -jnp.inf)
            maxval = jnp.max(masked, axis=-1, keepdims=True)
            idxs = jnp.where(masked == maxval, col, jnp.int32(C_pad))
            best = jnp.min(idxs, axis=-1, keepdims=True)   # (B_pad, 1) int32

            # commit index folded into spare lane C (exact: C < 2**24 in f32)
            out_ref[t] = jnp.where(col == C, best.astype(jnp.float32), pred)

            oh_next = (col == best).astype(mm_dtype)[:, :C_oh]
            return (oh_next, out, memory_new)

        lax.fori_loop(0, T, step, (oh0, st0, mem0))

    vmem_spec = pl.BlockSpec(memory_space=pltpu.MemorySpace.VMEM)
    in_bytes = int(proj_x.size + w_emb_cls.size + w_state_p.size
                   + w_out_p.size + b_out_b.size) * 4
    out_bytes = T * B_pad * C_pad * 4
    vmem_limit = int(min(96 * 2 ** 20, in_bytes + out_bytes + 8 * 2 ** 20))

    def cast(w):
        return jnp.asarray(w, mm_dtype)

    out = pl.pallas_call(
        kernel,
        out_shape=jax.ShapeDtypeStruct((T, B_pad, C_pad), jnp.float32),
        in_specs=[vmem_spec] * 5,
        out_specs=vmem_spec,
        compiler_params=pltpu.CompilerParams(vmem_limit_bytes=vmem_limit),
    )(proj_x, cast(w_emb_cls), cast(w_state_p), cast(w_out_p),
      jnp.asarray(b_out_b))

    # re-pack (drop padded rows): one gather, then static lane slices
    packed = jnp.take(out.reshape(T * B_pad, C_pad), flat_idx_j, axis=0)
    out_dists = packed[:, :C]
    out_commits = packed[:, C].astype(jnp.int32)
    return out_dists, out_commits


def reference_forward(seq_packed, batch_lengths, params):
    """Pure-JAX re-implementation mirroring the PyTorch eval forward."""
    H = params["w_state"].shape[0]
    E = params["embed"].shape[1]
    B = int(batch_lengths[0])
    prev_state = jnp.zeros((B, H), jnp.float32)
    prev_mem = jnp.zeros((B, H), jnp.float32)
    prev_emb = jnp.broadcast_to(params["embed"][0:1], (B, E))
    out_d, out_c = [], []
    end = 0
    for l in batch_lengths:
        start, end = end, end + l
        prev_state, prev_mem, prev_emb = prev_state[:l], prev_mem[:l], prev_emb[:l]
        x = seq_packed[start:end]
        inp = jnp.concatenate([x, prev_emb], axis=1)
        pi = jnp.dot(inp, params["w_input"], precision="highest") + params["b_input"]
        ps = jnp.dot(prev_state, params["w_state"], precision="highest") + params["b_state"]
        sl = lambda p, k: p[:, k * H:(k + 1) * H]
        ig = jax.nn.sigmoid(sl(pi, 0) + sl(ps, 0))
        fg = jax.nn.sigmoid(sl(pi, 1) + sl(ps, 1))
        mi = jnp.tanh(sl(pi, 2) + sl(ps, 2))
        og = jax.nn.sigmoid(sl(pi, 3) + sl(ps, 3))
        mem = ig * mi + fg * prev_mem
        out = og * jnp.tanh(mem)
        hg = jax.nn.sigmoid(sl(pi, 4) + sl(ps, 4))
        out = hg * out + (1.0 - hg) * sl(pi, 5)
        pred = jnp.dot(out, params["w_out"], precision="highest") + params["b_out"]
        best = jnp.argmax(pred[:, 1:], axis=1).astype(jnp.int32) + 1
        out_d.append(pred)
        out_c.append(best)
        prev_emb = params["embed"][best + 1]
        prev_state, prev_mem = out, mem
    return jnp.concatenate(out_d, 0), jnp.concatenate(out_c, 0)


def make_params(key, inputs_dim, embed_dim, hidden_dim, num_classes):
    ks = jax.random.split(key, 5)
    input_size = inputs_dim + embed_dim
    H, C, E = hidden_dim, num_classes, embed_dim
    return {
        # obj_edge_vectors (GloVe) replaced by deterministic random init
        "embed": jax.random.normal(ks[0], (C + 1, E), jnp.float32) * 0.1,
        "w_input": jax.random.normal(ks[1], (input_size, 6 * H), jnp.float32) * 0.1,
        "b_input": jnp.zeros((1, 6 * H), jnp.float32),   # init_parameters -> 0
        "w_state": jax.random.normal(ks[2], (H, 5 * H), jnp.float32) * 0.1,
        "b_state": jnp.zeros((1, 5 * H), jnp.float32),   # init_parameters -> 0
        "w_out": jax.random.normal(ks[3], (H, C), jnp.float32) * 0.1,
        "b_out": jax.random.normal(ks[4], (1, C), jnp.float32) * 0.1,
    }


if __name__ == "__main__":
    key = jax.random.PRNGKey(0)
    inputs_dim, embed_dim, hidden_dim, num_classes = 32, 16, 32, 12
    batch_lengths = [6, 6, 5, 3]                 # PackedSequence batch sizes
    total = sum(batch_lengths)

    kp, kx = jax.random.split(key)
    params = make_params(kp, inputs_dim, embed_dim, hidden_dim, num_classes)
    seq_packed = jax.random.normal(kx, (total, inputs_dim), jnp.float32)

    # f32 path: exact comparison against the pure-JAX reference.
    dists, commits = decoder_rnn_forward(seq_packed, batch_lengths, params)
    dists = jax.block_until_ready(dists)
    commits = jax.block_until_ready(commits)

    ref_dists, ref_commits = reference_forward(seq_packed, batch_lengths, params)
    assert dists.shape == (total, num_classes) and commits.shape == (total,)
    np.testing.assert_allclose(np.asarray(dists), np.asarray(ref_dists),
                               rtol=1e-4, atol=1e-4)
    np.testing.assert_array_equal(np.asarray(commits), np.asarray(ref_commits))

    # bf16 matmul-operand path (v6e/v7x fast path): run + sanity checks only,
    # since exact argmax commits may legitimately flip on near-ties in bf16.
    d16, c16 = decoder_rnn_forward(seq_packed, batch_lengths, params,
                                   use_bf16=True)
    d16 = jax.block_until_ready(d16)
    c16 = jax.block_until_ready(c16)
    assert d16.shape == (total, num_classes) and c16.shape == (total,)
    assert np.all(np.isfinite(np.asarray(d16)))
    assert np.all((np.asarray(c16) >= 1) & (np.asarray(c16) < num_classes))

    print("KERNEL_OK")
</pallas_src>

<mosaic_0001>
module attributes {stable_mosaic.version = 11 : i64} {
  func.func @kernel(%arg0: memref<4x8x256xf32, #tpu.memory_space<vmem>>, %arg1: memref<16x256xf32, #tpu.memory_space<vmem>>, %arg2: memref<32x256xf32, #tpu.memory_space<vmem>>, %arg3: memref<32x128xf32, #tpu.memory_space<vmem>>, %arg4: memref<8x128xf32, #tpu.memory_space<vmem>>, %arg5: memref<4x8x128xf32, #tpu.memory_space<vmem>>) attributes {dimension_semantics = [], scalar_prefetch = 0 : i64, scratch_operands = 0 : i64, tpu.core_type = #tpu.core_type<tc>} {
    %0 = tpu.iota {dimensions = array<i32: 1>} : vector<8x128xi32>
    %c1_i32 = arith.constant 1 : i32
    %1 = vector.broadcast %c1_i32 : i32 to vector<8x128xi32>
    %2 = arith.cmpi sge, %0, %1 : vector<8x128xi32>
    %c12_i32 = arith.constant 12 : i32
    %3 = vector.broadcast %c12_i32 : i32 to vector<8x128xi32>
    %4 = arith.cmpi slt, %0, %3 : vector<8x128xi32>
    %5 = arith.andi %2, %4 : vector<8x128xi1>
    %c0 = arith.constant 0 : index
    %c0_0 = arith.constant 0 : index
    %6 = vector.load %arg4[%c0, %c0_0] : memref<8x128xf32, #tpu.memory_space<vmem>>, vector<8x128xf32>
    %c0_i32 = arith.constant 0 : i32
    %7 = vector.broadcast %c0_i32 : i32 to vector<8x128xi32>
    %8 = arith.cmpi eq, %0, %7 : vector<8x128xi32>
    %9 = arith.extui %8 : vector<8x128xi1> to vector<8x128xi32>
    %10 = arith.sitofp %9 : vector<8x128xi32> to vector<8x128xf32>
    %11 = vector.extract_strided_slice %10 {offsets = [0, 0], sizes = [8, 16], strides = [1, 1]} : vector<8x128xf32> to vector<8x16xf32>
    %cst = arith.constant 0.000000e+00 : f32
    %12 = vector.broadcast %cst : f32 to vector<8x32xf32>
    %cst_1 = arith.constant 0.000000e+00 : f32
    %13 = vector.broadcast %cst_1 : f32 to vector<8x32xf32>
    %c0_i32_2 = arith.constant 0 : i32
    %c4_i32 = arith.constant 4 : i32
    %14 = arith.addi %c0_i32_2, %c4_i32 : i32
    %c1_i32_3 = arith.constant 1 : i32
    %15:3 = scf.for %arg6 = %c0_i32_2 to %14 step %c1_i32_3 iter_args(%arg7 = %11, %arg8 = %12, %arg9 = %13) -> (vector<8x16xf32>, vector<8x32xf32>, vector<8x32xf32>)  : i32 {
      %16 = arith.index_cast %arg6 : i32 to index
      %c0_5 = arith.constant 0 : index
      %c0_6 = arith.constant 0 : index
      %17 = vector.load %arg0[%16, %c0_5, %c0_6] : memref<4x8x256xf32, #tpu.memory_space<vmem>>, vector<1x8x256xf32>
      %18 = vector.shape_cast %17 : vector<1x8x256xf32> to vector<8x256xf32>
      %c0_7 = arith.constant 0 : index
      %c0_8 = arith.constant 0 : index
      %19 = vector.load %arg1[%c0_7, %c0_8] : memref<16x256xf32, #tpu.memory_space<vmem>>, vector<16x256xf32>
      %cst_9 = arith.constant dense<0.000000e+00> : vector<8x256xf32>
      %20 = tpu.matmul %arg7, %19, %cst_9 {dimension_numbers = #tpu.dot_dimension_numbers<[1], [0], [0], [1], [0, 0, 1, 1], [], []>} : vector<8x16xf32>, vector<16x256xf32>, vector<8x256xf32> -> vector<8x256xf32>
      %21 = arith.addf %18, %20 : vector<8x256xf32>
      %c0_10 = arith.constant 0 : index
      %c0_11 = arith.constant 0 : index
      %22 = vector.load %arg2[%c0_10, %c0_11] : memref<32x256xf32, #tpu.memory_space<vmem>>, vector<32x256xf32>
      %cst_12 = arith.constant dense<0.000000e+00> : vector<8x256xf32>
      %23 = tpu.matmul %arg8, %22, %cst_12 {dimension_numbers = #tpu.dot_dimension_numbers<[1], [0], [0], [1], [0, 0, 1, 1], [], []>} : vector<8x32xf32>, vector<32x256xf32>, vector<8x256xf32> -> vector<8x256xf32>
      %24 = arith.addf %21, %23 : vector<8x256xf32>
      %25 = vector.extract_strided_slice %24 {offsets = [0, 0], sizes = [8, 32], strides = [1, 1]} : vector<8x256xf32> to vector<8x32xf32>
      %26 = arith.negf %25 : vector<8x32xf32>
      %27 = math.exp %26 : vector<8x32xf32>
      %cst_13 = arith.constant 1.000000e+00 : f32
      %28 = vector.broadcast %cst_13 : f32 to vector<8x32xf32>
      %29 = arith.addf %28, %27 : vector<8x32xf32>
      %30 = arith.divf %28, %29 : vector<8x32xf32>
      %31 = vector.extract_strided_slice %24 {offsets = [0, 32], sizes = [8, 32], strides = [1, 1]} : vector<8x256xf32> to vector<8x32xf32>
      %32 = arith.negf %31 : vector<8x32xf32>
      %33 = math.exp %32 : vector<8x32xf32>
      %cst_14 = arith.constant 1.000000e+00 : f32
      %34 = vector.broadcast %cst_14 : f32 to vector<8x32xf32>
      %35 = arith.addf %34, %33 : vector<8x32xf32>
      %36 = arith.divf %34, %35 : vector<8x32xf32>
      %37 = vector.extract_strided_slice %24 {offsets = [0, 64], sizes = [8, 32], strides = [1, 1]} : vector<8x256xf32> to vector<8x32xf32>
      %38 = math.tanh %37 : vector<8x32xf32>
      %39 = vector.extract_strided_slice %24 {offsets = [0, 96], sizes = [8, 32], strides = [1, 1]} : vector<8x256xf32> to vector<8x32xf32>
      %40 = arith.negf %39 : vector<8x32xf32>
      %41 = math.exp %40 : vector<8x32xf32>
      %cst_15 = arith.constant 1.000000e+00 : f32
      %42 = vector.broadcast %cst_15 : f32 to vector<8x32xf32>
      %43 = arith.addf %42, %41 : vector<8x32xf32>
      %44 = arith.divf %42, %43 : vector<8x32xf32>
      %45 = arith.mulf %30, %38 : vector<8x32xf32>
      %46 = arith.mulf %36, %arg9 : vector<8x32xf32>
      %47 = arith.addf %45, %46 : vector<8x32xf32>
      %48 = math.tanh %47 : vector<8x32xf32>
      %49 = arith.mulf %44, %48 : vector<8x32xf32>
      %50 = vector.extract_strided_slice %24 {offsets = [0, 128], sizes = [8, 32], strides = [1, 1]} : vector<8x256xf32> to vector<8x32xf32>
      %51 = arith.negf %50 : vector<8x32xf32>
      %52 = math.exp %51 : vector<8x32xf32>
      %cst_16 = arith.constant 1.000000e+00 : f32
      %53 = vector.broadcast %cst_16 : f32 to vector<8x32xf32>
      %54 = arith.addf %53, %52 : vector<8x32xf32>
      %55 = arith.divf %53, %54 : vector<8x32xf32>
      %56 = arith.mulf %55, %49 : vector<8x32xf32>
      %cst_17 = arith.constant 1.000000e+00 : f32
      %57 = vector.broadcast %cst_17 : f32 to vector<8x32xf32>
      %58 = arith.subf %57, %55 : vector<8x32xf32>
      %59 = vector.extract_strided_slice %24 {offsets = [0, 160], sizes = [8, 32], strides = [1, 1]} : vector<8x256xf32> to vector<8x32xf32>
      %60 = arith.mulf %58, %59 : vector<8x32xf32>
      %61 = arith.addf %56, %60 : vector<8x32xf32>
      %c0_18 = arith.constant 0 : index
      %c0_19 = arith.constant 0 : index
      %62 = vector.load %arg3[%c0_18, %c0_19] : memref<32x128xf32, #tpu.memory_space<vmem>>, vector<32x128xf32>
      %cst_20 = arith.constant dense<0.000000e+00> : vector<8x128xf32>
      %63 = tpu.matmul %61, %62, %cst_20 {dimension_numbers = #tpu.dot_dimension_numbers<[1], [0], [0], [1], [0, 0, 1, 1], [], []>} : vector<8x32xf32>, vector<32x128xf32>, vector<8x128xf32> -> vector<8x128xf32>
      %64 = arith.addf %63, %6 : vector<8x128xf32>
      %cst_21 = arith.constant 0xFF800000 : f32
      %65 = vector.broadcast %cst_21 : f32 to vector<8x128xf32>
      %66 = arith.select %5, %64, %65 : vector<8x128xi1>, vector<8x128xf32>
      %cst_22 = arith.constant dense<0xFF800000> : vector<8xf32>
      %67 = vector.multi_reduction <maximumf>, %66, %cst_22 [1] : vector<8x128xf32> to vector<8xf32>
      %68 = vector.shape_cast %67 : vector<8xf32> to vector<8x1xf32>
      %69 = vector.broadcast %68 : vector<8x1xf32> to vector<8x128xf32>
      %70 = arith.cmpf oeq, %66, %69 : vector<8x128xf32>
      %c128_i32 = arith.constant 128 : i32
      %71 = vector.broadcast %c128_i32 : i32 to vector<8x128xi32>
      %72 = arith.select %70, %0, %71 : vector<8x128xi1>, vector<8x128xi32>
      %cst_23 = arith.constant dense<2147483647> : vector<8xi32>
      %73 = vector.multi_reduction <minsi>, %72, %cst_23 [1] : vector<8x128xi32> to vector<8xi32>
      %74 = vector.shape_cast %73 : vector<8xi32> to vector<8x1xi32>
      %c12_i32_24 = arith.constant 12 : i32
      %75 = vector.broadcast %c12_i32_24 : i32 to vector<8x128xi32>
      %76 = arith.cmpi eq, %0, %75 : vector<8x128xi32>
      %77 = arith.sitofp %74 : vector<8x1xi32> to vector<8x1xf32>
      %78 = vector.shape_cast %77 : vector<8x1xf32> to vector<8x1xf32>
      %79 = vector.broadcast %78 : vector<8x1xf32> to vector<8x128xf32>
      %80 = arith.select %76, %79, %64 : vector<8x128xi1>, vector<8x128xf32>
      %81 = arith.index_cast %arg6 : i32 to index
      %c0_25 = arith.constant 0 : index
      %c0_26 = arith.constant 0 : index
      %82 = vector.load %arg5[%81, %c0_25, %c0_26] : memref<4x8x128xf32, #tpu.memory_space<vmem>>, vector<1x8x128xf32>
      %83 = vector.shape_cast %82 : vector<1x8x128xf32> to vector<8x128xf32>
      %84 = vector.shape_cast %80 : vector<8x128xf32> to vector<1x8x128xf32>
      tpu.vector_store %arg5[%81, %c0_25, %c0_26], %84 {strides = array<i32>} : memref<4x8x128xf32, #tpu.memory_space<vmem>>, vector<1x8x128xf32>,
      %85 = vector.broadcast %74 : vector<8x1xi32> to vector<8x128xi32>
      %86 = arith.cmpi eq, %0, %85 : vector<8x128xi32>
      %87 = arith.extui %86 : vector<8x128xi1> to vector<8x128xi32>
      %88 = arith.sitofp %87 : vector<8x128xi32> to vector<8x128xf32>
      %89 = vector.extract_strided_slice %88 {offsets = [0, 0], sizes = [8, 16], strides = [1, 1]} : vector<8x128xf32> to vector<8x16xf32>
      scf.yield %89, %61, %47 : vector<8x16xf32>, vector<8x32xf32>, vector<8x32xf32>
    }
    %c4_i32_4 = arith.constant 4 : i32
    return
  }
}

</mosaic_0001>

<llo_original>
// kernel: tpu_custom_call.1
$region0: #{tpu_custom_call.1}
  #allocation0 [shape = 'u32[]', space=smem, size = 0x4, offset = 0x4, fixed_abs, tag = 'smem constant byte address 0x4 - core index']
  #allocation1 [shape = 'u32[72,128]{1,0:T(1,128)}', space=vmem, size = 0x9000, scoped, tag = 'internal scratch']
  %s0 = inlined_call_operand.hbm [shape: f32[4,8,256], index: 0, kind: input, shape index: {}]
  %s1 = inlined_call_operand.hbm [shape: f32[16,256], index: 1, kind: input, shape index: {}]
  %s2 = inlined_call_operand.hbm [shape: f32[32,256], index: 2, kind: input, shape index: {}]
  %s3 = inlined_call_operand.hbm [shape: f32[32,128], index: 3, kind: input, shape index: {}]
  %s4 = inlined_call_operand.hbm [shape: f32[8,128], index: 4, kind: input, shape index: {}]
  %s5 = inlined_call_operand.hbm [shape: f32[4,8,128], index: 5, kind: output, shape index: {}]
  %s6 = sld [smem:[#allocation0]]
  $region57: #{tpu_custom_call.1} parent=0
    _
  %s8 = ssub.s32 1, %s6
  %s9 = scalar_select 0, %s8, %s6
  $region1: #{tpu_custom_call.1} parent=0
    #allocation2 [shape = 'u8[32768]{0}', space=vmem, size = 0x8000, scoped, tag = 'input window, operand 0, single buffered']
    #allocation3 [shape = 's32[1]{0}', space=sflag, size = 0x4, scoped, tag = 'scoped memory for tpu_custom_call.1']
    #allocation4 [shape = 's32[1]{0}', space=sflag, size = 0x4, scoped, tag = 'scoped memory for tpu_custom_call.1']
    #allocation5 [shape = 'u8[16384]{0}', space=vmem, size = 0x4000, scoped, tag = 'input window, operand 1, single buffered']
    #allocation6 [shape = 's32[1]{0}', space=sflag, size = 0x4, scoped, tag = 'scoped memory for tpu_custom_call.1']
    #allocation7 [shape = 'u8[32768]{0}', space=vmem, size = 0x8000, scoped, tag = 'input window, operand 2, single buffered']
    #allocation8 [shape = 'u8[16384]{0}', space=vmem, size = 0x4000, scoped, tag = 'input window, operand 3, single buffered']
    #allocation9 [shape = 's32[1]{0}', space=sflag, size = 0x4, scoped, tag = 'scoped memory for tpu_custom_call.1']
    #allocation10 [shape = 'u8[4096]{0}', space=vmem, size = 0x1000, scoped, tag = 'input window, operand 4, single buffered']
    #allocation11 [shape = 'u8[16384]{0}', space=vmem, size = 0x4000, scoped, tag = 'output window, operand 0, single buffered']
    %10 = vsyncpa [#allocation3], 0
    %11 = vsyncpa [#allocation6], 0
    %12 = vsyncpa [#allocation9], 0
    %13 = vsyncpa [#allocation4], 0
    // Predicated region
    $region2: #{tpu_custom_call.1} parent=1 // pred_check
      _
    $region3: #{tpu_custom_call.1} parent=1 // pred_check_branch
      %15 = sbr.rel (0) target = $region5
    $region4: #{tpu_custom_call.1} parent=1 // pred_region
      %17 = vsyncadd [#allocation3], 0
      %s18 = sshll.u32 %s0, 4
      %s19 = int_to_ptr.hbm [resolvable:$true] %s18
      %s20 = sshll.u32 [#allocation2], 4
      %s21 = int_to_ptr.vmem [resolvable:$true] %s20
      %26 = dma.hbm_to_vmem [thread:$0]  %s19, 1024, %s21, [#allocation3], 256, 256, 16
    $region5: #{tpu_custom_call.1} parent=1 // pred_fallthru
      _
    // Predicated region
    $region6: #{tpu_custom_call.1} parent=1 // pred_check
      _
    $region7: #{tpu_custom_call.1} parent=1 // pred_check_branch
      %28 = sbr.rel (0) target = $region9
    $region8: #{tpu_custom_call.1} parent=1 // pred_region
      %30 = vsyncadd [#allocation6], 0
      %s31 = sshll.u32 %s1, 4
      %s32 = int_to_ptr.hbm [resolvable:$true] %s31
      %s33 = sshll.u32 [#allocation5], 4
      %s34 = int_to_ptr.vmem [resolvable:$true] %s33
      %39 = dma.hbm_to_vmem [thread:$0]  %s32, 512, %s34, [#allocation6], 256, 256, 16
    $region9: #{tpu_custom_call.1} parent=1 // pred_fallthru
      _
    // Predicated region
    $region10: #{tpu_custom_call.1} parent=1 // pred_check
      _
    $region11: #{tpu_custom_call.1} parent=1 // pred_check_branch
      %41 = sbr.rel (0) target = $region13
    $region12: #{tpu_custom_call.1} parent=1 // pred_region
      %43 = vsyncadd [#allocation6], 0
      %s44 = sshll.u32 %s2, 4
      %s45 = int_to_ptr.hbm [resolvable:$true] %s44
      %s46 = sshll.u32 [#allocation7], 4
      %s47 = int_to_ptr.vmem [resolvable:$true] %s46
      %52 = dma.hbm_to_vmem [thread:$0]  %s45, 1024, %s47, [#allocation6], 256, 256, 16
    $region13: #{tpu_custom_call.1} parent=1 // pred_fallthru
      _
    // Predicated region
    $region14: #{tpu_custom_call.1} parent=1 // pred_check
      _
    $region15: #{tpu_custom_call.1} parent=1 // pred_check_branch
      %54 = sbr.rel (0) target = $region17
    $region16: #{tpu_custom_call.1} parent=1 // pred_region
      %56 = vsyncadd [#allocation9], 0
      %s57 = sshll.u32 %s3, 4
      %s58 = int_to_ptr.hbm [resolvable:$true] %s57
      %s59 = sshll.u32 [#allocation8], 4
      %s60 = int_to_ptr.vmem [resolvable:$true] %s59
      %65 = dma.hbm_to_vmem [thread:$0]  %s58, 512, %s60, [#allocation9], 128, 128, 8
    $region17: #{tpu_custom_call.1} parent=1 // pred_fallthru
      _
    // Predicated region
    $region18: #{tpu_custom_call.1} parent=1 // pred_check
      _
    $region19: #{tpu_custom_call.1} parent=1 // pred_check_branch
      %67 = sbr.rel (0) target = $region21
    $region20: #{tpu_custom_call.1} parent=1 // pred_region
      %69 = vsyncadd [#allocation9], 0
      %s71 = sshll.u32 %s4, 4
      %s72 = int_to_ptr.hbm [resolvable:$true] %s71
      %s73 = sshll.u32 [#allocation10], 4
      %s74 = int_to_ptr.vmem [resolvable:$true] %s73
      %76 = dma.hbm_to_vmem [thread:$0]  %s72, 128, %s74, [#allocation9]
    $region21: #{tpu_custom_call.1} parent=1 // pred_fallthru
      _
    // Predicated region
    $region22: #{tpu_custom_call.1} parent=1 // pred_check
      _
    $region23: #{tpu_custom_call.1} parent=1 // pred_check_branch
      %78 = sbr.rel (0) target = $region25
    $region24: #{tpu_custom_call.1} parent=1 // pred_region
      %80 = dma.done [#allocation3], 1024
    $region25: #{tpu_custom_call.1} parent=1 // pred_fallthru
      _
    // Predicated region
    $region26: #{tpu_custom_call.1} parent=1 // pred_check
      _
    $region27: #{tpu_custom_call.1} parent=1 // pred_check_branch
      %82 = sbr.rel (0) target = $region29
    $region28: #{tpu_custom_call.1} parent=1 // pred_region
      %84 = dma.done [#allocation6], 512
    $region29: #{tpu_custom_call.1} parent=1 // pred_fallthru
      _
    // Predicated region
    $region30: #{tpu_custom_call.1} parent=1 // pred_check
      _
    $region31: #{tpu_custom_call.1} parent=1 // pred_check_branch
      %86 = sbr.rel (0) target = $region33
    $region32: #{tpu_custom_call.1} parent=1 // pred_region
      %88 = dma.done [#allocation6], 1024
    $region33: #{tpu_custom_call.1} parent=1 // pred_fallthru
      _
    // Predicated region
    $region34: #{tpu_custom_call.1} parent=1 // pred_check
      _
    $region35: #{tpu_custom_call.1} parent=1 // pred_check_branch
      %90 = sbr.rel (0) target = $region37
    $region36: #{tpu_custom_call.1} parent=1 // pred_region
      %92 = dma.done [#allocation9], 512
    $region37: #{tpu_custom_call.1} parent=1 // pred_fallthru
      _
    // Predicated region
    $region38: #{tpu_custom_call.1} parent=1 // pred_check
      _
    $region39: #{tpu_custom_call.1} parent=1 // pred_check_branch
      %94 = sbr.rel (0) target = $region41
    $region40: #{tpu_custom_call.1} parent=1 // pred_region
      %96 = dma.done [#allocation9], 128
    $region41: #{tpu_custom_call.1} parent=1 // pred_fallthru
      _
    %v97 = vlaneseq
    %v98 = vand.u32 %v97, 127
    %vm99 = vcmp.ge.s32.totalorder %v98, 1
    %vm100 = vcmp.lt.s32.totalorder %v98, 12
    %vm101 = vmand %vm99, %vm100
    %v102 = vld [vmem:[#allocation10] sm:$0xff]
    %vm103 = vcmp.eq.s32.totalorder %v98, 0
    %v104 = vsel %vm103, 1, 0
    %v105 = vcvt.s32.f32 %v104
    loop: start=0, step=1, limit=4
    $region42: #{tpu_custom_call.1} parent=1 // loop_pre_header
      _
    $region43: #{tpu_custom_call.1} parent=1 // loop_header
      %s107 = sphi 0, %s111
      %p108 = scmp.ge.s32.totalorder %s107, 4
      %v112 = vphi %v105, %v350
      %v113 = vphi 0.0, %v295
      %v114 = vphi 0.0, %v258
    $region44: #{tpu_custom_call.1} parent=1 // loop_header_branch
      %110 = sbr.rel (%p108) target = $region48
    $region45: #{tpu_custom_call.1} parent=1 // loop_body
      %s115 = smul.u32 %s107, 2
      %s116 = smul.addr %s115, 8
      %s117 = scalar_lea.vmem [#allocation2], %s116
      %v118 = vld [vmem:[%s117] sm:$0xff]
      %v119 = vld [vmem:[%s117 + $0x8] sm:$0xff]
      %v120 = vld [vmem:[#allocation5] sm:$0xff]
      %v121 = vld [vmem:[#allocation5 + $0x8] sm:$0xff]
      %v122 = vld [vmem:[#allocation5 + $0x10] sm:$0xff]
      %v123 = vld [vmem:[#allocation5 + $0x18] sm:$0xff]
      %vm124 = vcmask 130048
      %v126 = vsel %vm124, %v112, 0
      %128 = vmatpush.msra.mxu0 0.0
      %129 = vmatpush.msra.mxu0 0.0
      %130 = vmatpush.msra.mxu0 0.0
      %131 = vmatpush.msra.mxu0 0.0
      %132 = vmatpush.msra.mxu0 0.0
      %133 = vmatpush.msra.mxu0 0.0
      %134 = vmatpush.msra.mxu0 0.0
      %135 = vmatpush.msra.mxu0 0.0
      %136 = vmatpush.msra.mxu0 0.0
      %137 = vmatpush.msra.mxu0 0.0
      %138 = vmatpush.msra.mxu0 0.0
      %139 = vmatpush.msra.mxu0 0.0
      %140 = vmatpush.msra.mxu0 0.0
      %141 = vmatpush.msra.mxu0 0.0
      %142 = vmatpush.msra.mxu0 %v122
      %143 = vmatpush.msra.mxu0 %v120
      %144 = vmatmul.f32.gmra.mxu0 %v126
      %v145 = vpop.f32.mrf.mxu0
      %v146 = vadd.f32 0.0, %v145
      %147 = vdwg.mxu0
      %148 = vmatpush.msra.mxu0 0.0
      %149 = vmatpush.msra.mxu0 0.0
      %150 = vmatpush.msra.mxu0 0.0
      %151 = vmatpush.msra.mxu0 0.0
      %152 = vmatpush.msra.mxu0 0.0
      %153 = vmatpush.msra.mxu0 0.0
      %154 = vmatpush.msra.mxu0 0.0
      %155 = vmatpush.msra.mxu0 0.0
      %156 = vmatpush.msra.mxu0 0.0
      %157 = vmatpush.msra.mxu0 0.0
      %158 = vmatpush.msra.mxu0 0.0
      %159 = vmatpush.msra.mxu0 0.0
      %160 = vmatpush.msra.mxu0 0.0
      %161 = vmatpush.msra.mxu0 0.0
      %162 = vmatpush.msra.mxu0 %v123
      %163 = vmatpush.msra.mxu0 %v121
      %164 = vmatmul.f32.gmra.mxu0 %v126
      %v165 = vpop.f32.mrf.mxu0
      %v166 = vadd.f32 0.0, %v165
      %167 = vdwg.mxu0
      %v168 = vadd.f32 %v118, %v146
      %v169 = vadd.f32 %v119, %v166
      %v170 = vld [vmem:[#allocation7] sm:$0xff]
      %v171 = vld [vmem:[#allocation7 + $0x8] sm:$0xff]
      %v172 = vld [vmem:[#allocation7 + $0x10] sm:$0xff]
      %v173 = vld [vmem:[#allocation7 + $0x18] sm:$0xff]
      %v174 = vld [vmem:[#allocation7 + $0x20] sm:$0xff]
      %v175 = vld [vmem:[#allocation7 + $0x28] sm:$0xff]
      %v176 = vld [vmem:[#allocation7 + $0x30] sm:$0xff]
      %v177 = vld [vmem:[#allocation7 + $0x38] sm:$0xff]
      %vm178 = vcmask 261120
      %v180 = vsel %vm178, %v113, 0
      %182 = vmatpush.msra.mxu0 0.0
      %183 = vmatpush.msra.mxu0 0.0
      %184 = vmatpush.msra.mxu0 0.0
      %185 = vmatpush.msra.mxu0 0.0
      %186 = vmatpush.msra.mxu0 0.0
      %187 = vmatpush.msra.mxu0 0.0
      %188 = vmatpush.msra.mxu0 0.0
      %189 = vmatpush.msra.mxu0 0.0
      %190 = vmatpush.msra.mxu0 0.0
      %191 = vmatpush.msra.mxu0 0.0
      %192 = vmatpush.msra.mxu0 0.0
      %193 = vmatpush.msra.mxu0 0.0
      %194 = vmatpush.msra.mxu0 %v176
      %195 = vmatpush.msra.mxu0 %v174
      %196 = vmatpush.msra.mxu0 %v172
      %197 = vmatpush.msra.mxu0 %v170
      %198 = vmatmul.f32.gmra.mxu0 %v180
      %v199 = vpop.f32.mrf.mxu0
      %v200 = vadd.f32 0.0, %v199
      %201 = vdwg.mxu0
      %202 = vmatpush.msra.mxu0 0.0
      %203 = vmatpush.msra.mxu0 0.0
      %204 = vmatpush.msra.mxu0 0.0
      %205 = vmatpush.msra.mxu0 0.0
      %206 = vmatpush.msra.mxu0 0.0
      %207 = vmatpush.msra.mxu0 0.0
      %208 = vmatpush.msra.mxu0 0.0
      %209 = vmatpush.msra.mxu0 0.0
      %210 = vmatpush.msra.mxu0 0.0
      %211 = vmatpush.msra.mxu0 0.0
      %212 = vmatpush.msra.mxu0 0.0
      %213 = vmatpush.msra.mxu0 0.0
      %214 = vmatpush.msra.mxu0 %v177
      %215 = vmatpush.msra.mxu0 %v175
      %216 = vmatpush.msra.mxu0 %v173
      %217 = vmatpush.msra.mxu0 %v171
      %218 = vmatmul.f32.gmra.mxu0 %v180
      %v219 = vpop.f32.mrf.mxu0
      %v220 = vadd.f32 0.0, %v219
      %221 = vdwg.mxu0
      %v222 = vadd.f32 %v168, %v200
      %v223 = vadd.f32 %v169, %v220
      %v224 = vxor.u32 %v222, 2147483648
      %v225 = vmul.f32 %v224, 1.442695
      %v226 = vpow.pop %v225
      %v227 = vadd.f32 %v226, 1.0
      %v228 = vrcp.pop %v227
      %v229 = vmul.f32 %v227, %v228
      %v230 = vsub.f32 1.0, %v229
      %v231 = vmul.f32 %v228, %v230
      %v232 = vadd.f32 %v228, %v231
      %vm233 = vweird.f32 %v227
      %vm234 = vweird.f32 %v228
      %vm235 = vmor %vm233, %vm234
      %v236 = vsel %vm235, %v228, %v232
      %v237 = vand.u32 2147483647, %v227
      %vm238 = vcmp.eq.f32.partialorder %v237, 8.507059e+37
      %v239 = vand.u32 %v227, 2147483648
      %v240 = vor.u32 1.1754944e-38, %v239
      %v241 = vsel %vm238, %v240, %v236
      %v242 = vmul.f32 1.0, %v241
      %v243 = vtanh.pop %v222
      %245 = vrot.lane.b32.xlu0 %v243, 64
      %v246 = vpop.permute.xlu0 %245
      %v248 = vmul.f32 %v242, %v246
      %250 = vrot.lane.b32.xlu0 %v114, 32
      %v251 = vpop.permute.xlu0 %250
      %v253 = vmul.f32 %v242, %v251
      %255 = vrot.lane.b32.xlu0 %v253, 96
      %v256 = vpop.permute.xlu0 %255
      %v258 = vadd.f32 %v248, %v256
      %v259 = vtanh.pop %v258
      %261 = vrot.lane.b32.xlu0 %v259, 96
      %v262 = vpop.permute.xlu0 %261
      %v264 = vmul.f32 %v242, %v262
      %v265 = vxor.u32 %v223, 2147483648
      %v266 = vmul.f32 %v265, 1.442695
      %v267 = vpow.pop %v266
      %v268 = vadd.f32 %v267, 1.0
      %v269 = vrcp.pop %v268
      %v270 = vmul.f32 %v268, %v269
      %v271 = vsub.f32 1.0, %v270
      %v272 = vmul.f32 %v269, %v271
      %v273 = vadd.f32 %v269, %v272
      %vm274 = vweird.f32 %v268
      %vm275 = vweird.f32 %v269
      %vm276 = vmor %vm274, %vm275
      %v277 = vsel %vm276, %v269, %v273
      %v278 = vand.u32 2147483647, %v268
      %vm279 = vcmp.eq.f32.partialorder %v278, 8.507059e+37
      %v280 = vand.u32 %v268, 2147483648
      %v281 = vor.u32 1.1754944e-38, %v280
      %v282 = vsel %vm279, %v281, %v277
      %v283 = vmul.f32 1.0, %v282
      %285 = vrot.lane.b32.xlu0 %v264, 32
      %v286 = vpop.permute.xlu0 %285
      %v288 = vmul.f32 %v283, %v286
      %v289 = vsub.f32 1.0, %v283
      %291 = vrot.lane.b32.xlu0 %v223, 96
      %v292 = vpop.permute.xlu0 %291
      %v294 = vmul.f32 %v289, %v292
      %v295 = vadd.f32 %v288, %v294
      %v296 = vld [vmem:[#allocation8] sm:$0xff]
      %v297 = vld [vmem:[#allocation8 + $0x8] sm:$0xff]
      %v298 = vld [vmem:[#allocation8 + $0x10] sm:$0xff]
      %v299 = vld [vmem:[#allocation8 + $0x18] sm:$0xff]
      %v301 = vsel %vm178, %v295, 0
      %303 = vmatpush.msra.mxu0 0.0
      %304 = vmatpush.msra.mxu0 0.0
      %305 = vmatpush.msra.mxu0 0.0
      %306 = vmatpush.msra.mxu0 0.0
      %307 = vmatpush.msra.mxu0 0.0
      %308 = vmatpush.msra.mxu0 0.0
      %309 = vmatpush.msra.mxu0 0.0
      %310 = vmatpush.msra.mxu0 0.0
      %311 = vmatpush.msra.mxu0 0.0
      %312 = vmatpush.msra.mxu0 0.0
      %313 = vmatpush.msra.mxu0 0.0
      %314 = vmatpush.msra.mxu0 0.0
      %315 = vmatpush.msra.mxu0 %v299
      %316 = vmatpush.msra.mxu0 %v298
      %317 = vmatpush.msra.mxu0 %v297
      %318 = vmatpush.msra.mxu0 %v296
      %319 = vmatmul.f32.gmra.mxu0 %v301
      %v320 = vpop.f32.mrf.mxu0
      %v321 = vadd.f32 %v102, %v320
      %322 = vdwg.mxu0
      %v323 = vsel %vm101, %v321, -inf
      %324 = vmax.xlane.f32.xlu0 %v323
      %v325 = vpop.xlane.xlu0 %324
      %vm326 = vcmp.eq.f32.partialorder %v323, %v325
      %v327 = vsel %vm326, %v98, 128
      %v328 = vand.u32 %v327, 65535
      %v329 = vshra.s32 %v327, 16
      %v330 = vcvt.s32.f32 %v328
      %v331 = vcvt.s32.f32 %v329
      %332 = vmin.xlane.f32.xlu0 %v331
      %v333 = vpop.xlane.xlu0 %332
      %vm334 = vcmp.eq.f32.partialorder %v331, %v333
      %v335 = vsel %vm334, %v330, inf
      %336 = vmin.xlane.f32.xlu0 %v335
      %v337 = vpop.xlane.xlu0 %336
      %v338 = vcvt.f32.s32 %v337
      %v339 = vcvt.f32.s32 %v333
      %v340 = vshll.u32 %v339, 16
      %v341 = vadd.s32 %v340, %v338
      %vm342 = vcmp.eq.s32.totalorder %v98, 12
      %v343 = vcvt.s32.f32 %v341
      %v344 = vsel %vm342, %v343, %v321
      %s345 = smul.u32 %s107, 8
      %s346 = scalar_lea.vmem [#allocation11], %s345
      %347 = vst [vmem:[%s346] sm:$0xff] %v344
      %vm348 = vcmp.eq.s32.totalorder %v98, %v341
      %v349 = vsel %vm348, 1, 0
      %v350 = vcvt.s32.f32 %v349
    $region46: #{tpu_custom_call.1} parent=1 // loop_footer
      %s111 = sadd.s32 1, %s107
    $region47: #{tpu_custom_call.1} parent=1 // loop_footer_branch
      %106 = sbr.rel target = $region43
    $region48: #{tpu_custom_call.1} parent=1 // loop_exit
      _
    // Predicated region
    $region49: #{tpu_custom_call.1} parent=1 // pred_check
      _
    $region50: #{tpu_custom_call.1} parent=1 // pred_check_branch
      %352 = sbr.rel (0) target = $region52
    $region51: #{tpu_custom_call.1} parent=1 // pred_region
      %354 = vsyncadd [#allocation4], 0
      %s355 = sshll.u32 [#allocation11], 4
      %s356 = int_to_ptr.vmem [resolvable:$true] %s355
      %s357 = sshll.u32 %s5, 4
      %s358 = int_to_ptr.hbm [resolvable:$true] %s357
      %363 = dma.vmem_to_hbm [thread:$0]  %s356, 512, %s358, [#allocation4], 128, 128, 8
    $region52: #{tpu_custom_call.1} parent=1 // pred_fallthru
      _
    // Predicated region
    $region53: #{tpu_custom_call.1} parent=1 // pred_check
      _
    $region54: #{tpu_custom_call.1} parent=1 // pred_check_branch
      %365 = sbr.rel (0) target = $region56
    $region55: #{tpu_custom_call.1} parent=1 // pred_region
      %367 = dma.done [#allocation4], 512
    $region56: #{tpu_custom_call.1} parent=1 // pred_fallthru
      _
    %368 = vsyncpa [#allocation3], 1
    %369 = vsyncpa [#allocation6], 1
    %370 = vsyncpa [#allocation9], 1
    %371 = vsyncpa [#allocation4], 1

</llo_original>
